<compile_context>
chip_gen: v6e
topology: v6e:2x2x1
jax: 0.10.0
libtpu: 0.0.40
codegen_flags: <defaults>
</compile_context>

<pallas_src>
import functools

import jax
import jax.numpy as jnp
from jax.experimental import pallas as pl
from jax.experimental.pallas import tpu as pltpu

LANE = 128
SUBLANE = 8


def _round_up(x, m):
    return (x + m - 1) // m * m


# ---------------------------------------------------------------------------
# Kernel: 4 matmuls (bf16 operands, f32 accumulate), operands VMEM-resident.
# ---------------------------------------------------------------------------
def ddqn_kernel(x_ref,
                w1_ref, b1_ref, w2_ref, b2_ref,     # shared feature MLP
                wh1_ref, bh1_ref,                   # fused head layer 1 (adv|val)
                wq_ref, bq_ref,                     # fused head layer 2 + dueling mean
                out_ref):
    a_size = out_ref.shape[-1]

    x = x_ref[...].astype(jnp.bfloat16)
    h = jnp.maximum(
        jnp.dot(x, w1_ref[...], preferred_element_type=jnp.float32) + b1_ref[...], 0.0)
    h = jnp.maximum(
        jnp.dot(h.astype(jnp.bfloat16), w2_ref[...],
                preferred_element_type=jnp.float32) + b2_ref[...], 0.0)
    hh = jnp.maximum(
        jnp.dot(h.astype(jnp.bfloat16), wh1_ref[...],
                preferred_element_type=jnp.float32) + bh1_ref[...], 0.0)
    # Q (already includes +val and -mean(adv) via the fused weight). wq is
    # padded to 128 lanes (single MXU pass even on v5e); only the first
    # action_size columns are stored (masked narrow store -> minimal HBM
    # writeback; cost hidden under MXU cadence).
    q = jnp.dot(hh.astype(jnp.bfloat16), wq_ref[...],
                preferred_element_type=jnp.float32) + bq_ref[...]
    out_ref[...] = q[:, :a_size]


# ---------------------------------------------------------------------------
# One-time parameter fusion (do this once, not per forward call).
# ---------------------------------------------------------------------------
def fuse_params(p):
    wa1, ba1 = p["wa1"], p["ba1"]
    wv1, bv1 = p["wv1"], p["bv1"]
    wa2, ba2 = p["wa2"], p["ba2"]
    wv2, bv2 = p["wv2"], p["bv2"]
    action_size = wa2.shape[1]
    n_out = _round_up(action_size, LANE)

    # Fused head layer 1: h2 @ [wa1 | wv1]  -> [.., 64] = [a1 | v1]
    wh1 = jnp.concatenate([wa1, wv1], axis=1)           # [64, 64]
    bh1 = jnp.concatenate([ba1, bv1], axis=1)           # [1, 64]

    # Fused head layer 2 with the dueling mean folded in (exact algebra).
    wa2_centered = wa2 - jnp.mean(wa2, axis=1, keepdims=True)        # [32, A]
    wv2_bcast = jnp.broadcast_to(wv2, (wv2.shape[0], action_size))   # [32, A]
    wq = jnp.concatenate([wa2_centered, wv2_bcast], axis=0)          # [64, A]
    bq = ba2 - jnp.mean(ba2, axis=1, keepdims=True) + bv2            # [1, A]

    # Pad wq/bq to a lane-dense 128-wide block (one MXU pass); padded columns
    # are zero and never stored (kernel writes only :action_size columns).
    wq = jnp.pad(wq, ((0, 0), (0, n_out - action_size)))
    bq = jnp.pad(bq, ((0, 0), (0, n_out - action_size)))

    # Cast matmul weights to bf16 once (biases stay f32; f32 accumulation).
    bf16 = jnp.bfloat16
    return dict(w1=p["w1"].astype(bf16), b1=p["b1"],
                w2=p["w2"].astype(bf16), b2=p["b2"],
                wh1=wh1.astype(bf16), bh1=bh1,
                wq=wq.astype(bf16), bq=bq), action_size


# ---------------------------------------------------------------------------
# Tile selection: amortize per-step overhead, keep >=2 steps for v7x 2-TC
# sharding on large batches, never blow up the batch with blind round-up.
# ---------------------------------------------------------------------------
def _pick_tile(b_eff, tb_max):
    n_tiles = max(1, -(-b_eff // tb_max))
    if n_tiles == 1 and b_eff >= 1024:
        n_tiles = 2            # let v7x split the "parallel" axis across 2 TCs
    return _round_up(-(-b_eff // n_tiles), SUBLANE)


# ---------------------------------------------------------------------------
# Wrapper: batch-tiled pallas_call with VMEM-resident weights.
# ---------------------------------------------------------------------------
@functools.partial(jax.jit, static_argnames=("action_size", "tb_max"))
def ddqn_forward(x, fused, action_size, *, tb_max=2048):
    B, S = x.shape

    # Only pad rows when B is not a multiple of 8 (typical DQN batches are).
    b_eff = _round_up(max(B, 1), SUBLANE)
    if b_eff != B:
        x = jnp.pad(x, ((0, b_eff - B), (0, 0)))

    tb = _pick_tile(b_eff, tb_max)
    grid = (pl.cdiv(b_eff, tb),)

    def batch_map(i):
        return (i, 0)

    def resident_map(i):
        return (0, 0)

    in_specs = [
        pl.BlockSpec((tb, S), batch_map),
        pl.BlockSpec(fused["w1"].shape, resident_map),
        pl.BlockSpec(fused["b1"].shape, resident_map),
        pl.BlockSpec(fused["w2"].shape, resident_map),
        pl.BlockSpec(fused["b2"].shape, resident_map),
        pl.BlockSpec(fused["wh1"].shape, resident_map),
        pl.BlockSpec(fused["bh1"].shape, resident_map),
        pl.BlockSpec(fused["wq"].shape, resident_map),
        pl.BlockSpec(fused["bq"].shape, resident_map),
    ]
    # Output last dim = action_size = full array extent (legal even though
    # < 128); narrow masked stores, no 128-wide padded Q writeback.
    out_spec = pl.BlockSpec((tb, action_size), batch_map)

    n_out = fused["wq"].shape[1]
    weight_bytes = sum(int(v.size) * v.dtype.itemsize for v in fused.values())
    cost = pl.CostEstimate(
        flops=2 * b_eff * (S * 64 + 64 * 64 + 64 * 64 + 64 * n_out),
        transcendentals=0,
        bytes_accessed=4 * b_eff * (S + action_size) + weight_bytes,
    )

    out = pl.pallas_call(
        ddqn_kernel,
        out_shape=jax.ShapeDtypeStruct((b_eff, action_size), jnp.float32),
        grid=grid,
        in_specs=in_specs,
        out_specs=out_spec,
        compiler_params=pltpu.CompilerParams(
            dimension_semantics=("parallel",)),
        cost_estimate=cost,
    )(x, fused["w1"], fused["b1"], fused["w2"], fused["b2"],
      fused["wh1"], fused["bh1"], fused["wq"], fused["bq"])

    if b_eff != B:
        out = out[:B]
    return out


# ---------------------------------------------------------------------------
# Init + pure-JAX reference (matches the PyTorch module semantics).
# ---------------------------------------------------------------------------
def init_linear(key, fan_in, fan_out):
    kw, kb = jax.random.split(key)
    bound = 1.0 / jnp.sqrt(jnp.float32(fan_in))
    w = jax.random.uniform(kw, (fan_in, fan_out), jnp.float32, -bound, bound)
    b = jax.random.uniform(kb, (1, fan_out), jnp.float32, -bound, bound)
    return w, b


def init_params(key, state_size, action_size):
    keys = jax.random.split(key, 6)
    w1, b1 = init_linear(keys[0], state_size, 64)
    w2, b2 = init_linear(keys[1], 64, 64)
    wa1, ba1 = init_linear(keys[2], 64, 32)
    wa2, ba2 = init_linear(keys[3], 32, action_size)
    wv1, bv1 = init_linear(keys[4], 64, 32)
    wv2, bv2 = init_linear(keys[5], 32, 1)
    return dict(w1=w1, b1=b1, w2=w2, b2=b2,
                wa1=wa1, ba1=ba1, wa2=wa2, ba2=ba2,
                wv1=wv1, bv1=bv1, wv2=wv2, bv2=bv2)


def ddqn_reference(x, p):
    h = jnp.maximum(x @ p["w1"] + p["b1"], 0.0)
    h = jnp.maximum(h @ p["w2"] + p["b2"], 0.0)
    a = jnp.maximum(h @ p["wa1"] + p["ba1"], 0.0)
    adv = a @ p["wa2"] + p["ba2"]
    v = jnp.maximum(h @ p["wv1"] + p["bv1"], 0.0)
    val = v @ p["wv2"] + p["bv2"]
    return val + adv - jnp.mean(adv, axis=1, keepdims=True)


if __name__ == "__main__":
    state_size = 8
    action_size = 4
    batch = 2

    key = jax.random.PRNGKey(0)
    kx, kp, kx2 = jax.random.split(key, 3)
    x = jax.random.normal(kx, (batch, state_size), jnp.float32)
    params = init_params(kp, state_size, action_size)
    fused, A = fuse_params(params)

    # Small-batch correctness check (bf16 matmul operands -> loose tolerance).
    out = ddqn_forward(x, fused, A)
    jax.block_until_ready(out)
    ref = ddqn_reference(x, params)
    assert out.shape == (batch, action_size)
    assert jnp.allclose(out, ref, atol=3e-2, rtol=3e-2), float(
        jnp.max(jnp.abs(out - ref)))

    # Larger batch to exercise the tiled grid + partial-block path.
    x_big = jax.random.normal(kx2, (1000, state_size), jnp.float32)
    out_big = ddqn_forward(x_big, fused, A)
    jax.block_until_ready(out_big)
    ref_big = ddqn_reference(x_big, params)
    assert out_big.shape == (1000, action_size)
    assert jnp.allclose(out_big, ref_big, atol=3e-2, rtol=3e-2), float(
        jnp.max(jnp.abs(out_big - ref_big)))

    print("KERNEL_OK")
</pallas_src>

<mosaic_0001>
module attributes {stable_mosaic.version = 11 : i64} {
  func.func @ddqn_kernel(%arg0: i32, %arg1: memref<8x8xf32, #tpu.memory_space<vmem>>, %arg2: memref<8x64xbf16, #tpu.memory_space<vmem>>, %arg3: memref<1x64xf32, #tpu.memory_space<vmem>>, %arg4: memref<64x64xbf16, #tpu.memory_space<vmem>>, %arg5: memref<1x64xf32, #tpu.memory_space<vmem>>, %arg6: memref<64x64xbf16, #tpu.memory_space<vmem>>, %arg7: memref<1x64xf32, #tpu.memory_space<vmem>>, %arg8: memref<64x128xbf16, #tpu.memory_space<vmem>>, %arg9: memref<1x128xf32, #tpu.memory_space<vmem>>, %arg10: memref<8x4xf32, #tpu.memory_space<vmem>>) attributes {dimension_semantics = [#tpu.dimension_semantics<parallel>], iteration_bounds = array<i64: 1>, scalar_prefetch = 0 : i64, scratch_operands = 0 : i64, tpu.core_type = #tpu.core_type<tc>, window_params = [{transform_indices = @transform_0, window_bounds = array<i64: 8, 8>}, {pipeline_mode = #tpu.pipeline_mode<synchronous>, transform_indices = @transform_1, window_bounds = array<i64: 8, 64>}, {pipeline_mode = #tpu.pipeline_mode<synchronous>, transform_indices = @transform_2, window_bounds = array<i64: 1, 64>}, {pipeline_mode = #tpu.pipeline_mode<synchronous>, transform_indices = @transform_3, window_bounds = array<i64: 64, 64>}, {pipeline_mode = #tpu.pipeline_mode<synchronous>, transform_indices = @transform_4, window_bounds = array<i64: 1, 64>}, {pipeline_mode = #tpu.pipeline_mode<synchronous>, transform_indices = @transform_5, window_bounds = array<i64: 64, 64>}, {pipeline_mode = #tpu.pipeline_mode<synchronous>, transform_indices = @transform_6, window_bounds = array<i64: 1, 64>}, {pipeline_mode = #tpu.pipeline_mode<synchronous>, transform_indices = @transform_7, window_bounds = array<i64: 64, 128>}, {pipeline_mode = #tpu.pipeline_mode<synchronous>, transform_indices = @transform_8, window_bounds = array<i64: 1, 128>}, {transform_indices = @transform_9, window_bounds = array<i64: 8, 4>}]} {
    %c0 = arith.constant 0 : index
    %c0_0 = arith.constant 0 : index
    %0 = vector.load %arg1[%c0, %c0_0] : memref<8x8xf32, #tpu.memory_space<vmem>>, vector<8x8xf32>
    %1 = arith.truncf %0 : vector<8x8xf32> to vector<8x8xbf16>
    %c0_1 = arith.constant 0 : index
    %c0_2 = arith.constant 0 : index
    %2 = vector.load %arg2[%c0_1, %c0_2] : memref<8x64xbf16, #tpu.memory_space<vmem>>, vector<8x64xbf16>
    %cst = arith.constant dense<0.000000e+00> : vector<8x64xf32>
    %3 = tpu.matmul %1, %2, %cst {dimension_numbers = #tpu.dot_dimension_numbers<[1], [0], [0], [1], [0, 0, 1, 1], [], []>} : vector<8x8xbf16>, vector<8x64xbf16>, vector<8x64xf32> -> vector<8x64xf32>
    %c0_3 = arith.constant 0 : index
    %c0_4 = arith.constant 0 : index
    %4 = vector.load %arg3[%c0_3, %c0_4] : memref<1x64xf32, #tpu.memory_space<vmem>>, vector<1x64xf32>
    %5 = vector.broadcast %4 : vector<1x64xf32> to vector<8x64xf32>
    %6 = arith.addf %3, %5 : vector<8x64xf32>
    %cst_5 = arith.constant 0.000000e+00 : f32
    %7 = vector.broadcast %cst_5 : f32 to vector<8x64xf32>
    %8 = arith.maximumf %6, %7 : vector<8x64xf32>
    %9 = arith.truncf %8 : vector<8x64xf32> to vector<8x64xbf16>
    %c0_6 = arith.constant 0 : index
    %c0_7 = arith.constant 0 : index
    %10 = vector.load %arg4[%c0_6, %c0_7] : memref<64x64xbf16, #tpu.memory_space<vmem>>, vector<64x64xbf16>
    %cst_8 = arith.constant dense<0.000000e+00> : vector<8x64xf32>
    %11 = tpu.matmul %9, %10, %cst_8 {dimension_numbers = #tpu.dot_dimension_numbers<[1], [0], [0], [1], [0, 0, 1, 1], [], []>} : vector<8x64xbf16>, vector<64x64xbf16>, vector<8x64xf32> -> vector<8x64xf32>
    %c0_9 = arith.constant 0 : index
    %c0_10 = arith.constant 0 : index
    %12 = vector.load %arg5[%c0_9, %c0_10] : memref<1x64xf32, #tpu.memory_space<vmem>>, vector<1x64xf32>
    %13 = vector.broadcast %12 : vector<1x64xf32> to vector<8x64xf32>
    %14 = arith.addf %11, %13 : vector<8x64xf32>
    %cst_11 = arith.constant 0.000000e+00 : f32
    %15 = vector.broadcast %cst_11 : f32 to vector<8x64xf32>
    %16 = arith.maximumf %14, %15 : vector<8x64xf32>
    %17 = arith.truncf %16 : vector<8x64xf32> to vector<8x64xbf16>
    %c0_12 = arith.constant 0 : index
    %c0_13 = arith.constant 0 : index
    %18 = vector.load %arg6[%c0_12, %c0_13] : memref<64x64xbf16, #tpu.memory_space<vmem>>, vector<64x64xbf16>
    %cst_14 = arith.constant dense<0.000000e+00> : vector<8x64xf32>
    %19 = tpu.matmul %17, %18, %cst_14 {dimension_numbers = #tpu.dot_dimension_numbers<[1], [0], [0], [1], [0, 0, 1, 1], [], []>} : vector<8x64xbf16>, vector<64x64xbf16>, vector<8x64xf32> -> vector<8x64xf32>
    %c0_15 = arith.constant 0 : index
    %c0_16 = arith.constant 0 : index
    %20 = vector.load %arg7[%c0_15, %c0_16] : memref<1x64xf32, #tpu.memory_space<vmem>>, vector<1x64xf32>
    %21 = vector.broadcast %20 : vector<1x64xf32> to vector<8x64xf32>
    %22 = arith.addf %19, %21 : vector<8x64xf32>
    %cst_17 = arith.constant 0.000000e+00 : f32
    %23 = vector.broadcast %cst_17 : f32 to vector<8x64xf32>
    %24 = arith.maximumf %22, %23 : vector<8x64xf32>
    %25 = arith.truncf %24 : vector<8x64xf32> to vector<8x64xbf16>
    %c0_18 = arith.constant 0 : index
    %c0_19 = arith.constant 0 : index
    %26 = vector.load %arg8[%c0_18, %c0_19] : memref<64x128xbf16, #tpu.memory_space<vmem>>, vector<64x128xbf16>
    %cst_20 = arith.constant dense<0.000000e+00> : vector<8x128xf32>
    %27 = tpu.matmul %25, %26, %cst_20 {dimension_numbers = #tpu.dot_dimension_numbers<[1], [0], [0], [1], [0, 0, 1, 1], [], []>} : vector<8x64xbf16>, vector<64x128xbf16>, vector<8x128xf32> -> vector<8x128xf32>
    %c0_21 = arith.constant 0 : index
    %c0_22 = arith.constant 0 : index
    %28 = vector.load %arg9[%c0_21, %c0_22] : memref<1x128xf32, #tpu.memory_space<vmem>>, vector<1x128xf32>
    %29 = vector.broadcast %28 : vector<1x128xf32> to vector<8x128xf32>
    %30 = arith.addf %27, %29 : vector<8x128xf32>
    %31 = vector.extract_strided_slice %30 {offsets = [0, 0], sizes = [8, 4], strides = [1, 1]} : vector<8x128xf32> to vector<8x4xf32>
    %c0_23 = arith.constant 0 : index
    %c0_24 = arith.constant 0 : index
    %32 = vector.load %arg10[%c0_23, %c0_24] : memref<8x4xf32, #tpu.memory_space<vmem>>, vector<8x4xf32>
    tpu.vector_store %arg10[%c0_23, %c0_24], %31 {strides = array<i32>} : memref<8x4xf32, #tpu.memory_space<vmem>>, vector<8x4xf32>,
    return
  }
  func.func @transform_0(%arg0: i32) -> (i32, i32) {
    %c0_i32 = arith.constant 0 : i32
    %c0_i32_0 = arith.constant 0 : i32
    return %arg0, %c0_i32 : i32, i32
  }
  func.func @transform_1(%arg0: i32) -> (i32, i32) {
    %c0_i32 = arith.constant 0 : i32
    %c0_i32_0 = arith.constant 0 : i32
    %c0_i32_1 = arith.constant 0 : i32
    return %c0_i32, %c0_i32_0 : i32, i32
  }
  func.func @transform_2(%arg0: i32) -> (i32, i32) {
    %c0_i32 = arith.constant 0 : i32
    %c0_i32_0 = arith.constant 0 : i32
    %c0_i32_1 = arith.constant 0 : i32
    return %c0_i32, %c0_i32_0 : i32, i32
  }
  func.func @transform_3(%arg0: i32) -> (i32, i32) {
    %c0_i32 = arith.constant 0 : i32
    %c0_i32_0 = arith.constant 0 : i32
    %c0_i32_1 = arith.constant 0 : i32
    return %c0_i32, %c0_i32_0 : i32, i32
  }
  func.func @transform_4(%arg0: i32) -> (i32, i32) {
    %c0_i32 = arith.constant 0 : i32
    %c0_i32_0 = arith.constant 0 : i32
    %c0_i32_1 = arith.constant 0 : i32
    return %c0_i32, %c0_i32_0 : i32, i32
  }
  func.func @transform_5(%arg0: i32) -> (i32, i32) {
    %c0_i32 = arith.constant 0 : i32
    %c0_i32_0 = arith.constant 0 : i32
    %c0_i32_1 = arith.constant 0 : i32
    return %c0_i32, %c0_i32_0 : i32, i32
  }
  func.func @transform_6(%arg0: i32) -> (i32, i32) {
    %c0_i32 = arith.constant 0 : i32
    %c0_i32_0 = arith.constant 0 : i32
    %c0_i32_1 = arith.constant 0 : i32
    return %c0_i32, %c0_i32_0 : i32, i32
  }
  func.func @transform_7(%arg0: i32) -> (i32, i32) {
    %c0_i32 = arith.constant 0 : i32
    %c0_i32_0 = arith.constant 0 : i32
    %c0_i32_1 = arith.constant 0 : i32
    return %c0_i32, %c0_i32_0 : i32, i32
  }
  func.func @transform_8(%arg0: i32) -> (i32, i32) {
    %c0_i32 = arith.constant 0 : i32
    %c0_i32_0 = arith.constant 0 : i32
    %c0_i32_1 = arith.constant 0 : i32
    return %c0_i32, %c0_i32_0 : i32, i32
  }
  func.func @transform_9(%arg0: i32) -> (i32, i32) {
    %c0_i32 = arith.constant 0 : i32
    %c0_i32_0 = arith.constant 0 : i32
    return %arg0, %c0_i32 : i32, i32
  }
}

</mosaic_0001>

<llo_original>
// kernel: ddqn_forward.1
$region0: #{ddqn_forward.1}
  #allocation0 [shape = 'u32[]', space=smem, size = 0x4, offset = 0x4, fixed_abs, tag = 'smem constant byte address 0x4 - core index']
  #allocation1 [shape = 'u32[144,128]{1,0:T(1,128)}', space=vmem, size = 0x12000, scoped, tag = 'internal scratch']
  %s0 = inlined_call_operand.vmem [shape: f32[8,8], index: 0, kind: input, shape index: {}]
  %s1 = inlined_call_operand.vmem [shape: bf16[8,64], index: 1, kind: input, shape index: {}]
  %s2 = inlined_call_operand.vmem [shape: f32[1,64], index: 2, kind: input, shape index: {}]
  %s3 = inlined_call_operand.hbm [shape: bf16[64,64], index: 3, kind: input, shape index: {}]
  %s4 = inlined_call_operand.vmem [shape: f32[1,64], index: 4, kind: input, shape index: {}]
  %s5 = inlined_call_operand.hbm [shape: bf16[64,64], index: 5, kind: input, shape index: {}]
  %s6 = inlined_call_operand.vmem [shape: f32[1,64], index: 6, kind: input, shape index: {}]
  %s7 = inlined_call_operand.hbm [shape: bf16[64,128], index: 7, kind: input, shape index: {}]
  %s8 = inlined_call_operand.vmem [shape: f32[1,128], index: 8, kind: input, shape index: {}]
  %s9 = inlined_call_operand.vmem [shape: f32[8,4], index: 9, kind: output, shape index: {}]
  %s10 = sld [smem:[#allocation0]]
  $region58: #{ddqn_forward.1} parent=0
    _
  %s12 = ssub.s32 1, %s10
  %s13 = scalar_select 0, %s12, %s10
  $region1: #{ddqn_forward.1} parent=0
    #allocation2 [shape = 'u8[16384]{0}', space=vmem, size = 0x4000, scoped, tag = 'input window, operand 3, single buffered']
    #allocation3 [shape = 's32[1]{0}', space=sflag, size = 0x4, scoped, tag = 'scoped memory for ddqn_forward.1']
    #allocation4 [shape = 'u8[16384]{0}', space=vmem, size = 0x4000, scoped, tag = 'input window, operand 5, single buffered']
    #allocation5 [shape = 's32[1]{0}', space=sflag, size = 0x4, scoped, tag = 'scoped memory for ddqn_forward.1']
    #allocation6 [shape = 'u8[16384]{0}', space=vmem, size = 0x4000, scoped, tag = 'input window, operand 7, single buffered']
    %14 = vsyncpa [#allocation3], 0
    %15 = vsyncpa [#allocation5], 0
    // Predicated region
    $region2: #{ddqn_forward.1} parent=1 // pred_check
      _
    $region3: #{ddqn_forward.1} parent=1 // pred_check_branch
      %17 = sbr.rel (0) target = $region5
    $region4: #{ddqn_forward.1} parent=1 // pred_region
      _
    $region5: #{ddqn_forward.1} parent=1 // pred_fallthru
      _
    // Predicated region
    $region6: #{ddqn_forward.1} parent=1 // pred_check
      _
    $region7: #{ddqn_forward.1} parent=1 // pred_check_branch
      %19 = sbr.rel (0) target = $region9
    $region8: #{ddqn_forward.1} parent=1 // pred_region
      _
    $region9: #{ddqn_forward.1} parent=1 // pred_fallthru
      _
    // Predicated region
    $region10: #{ddqn_forward.1} parent=1 // pred_check
      _
    $region11: #{ddqn_forward.1} parent=1 // pred_check_branch
      %21 = sbr.rel (0) target = $region13
    $region12: #{ddqn_forward.1} parent=1 // pred_region
      _
    $region13: #{ddqn_forward.1} parent=1 // pred_fallthru
      _
    // Predicated region
    $region14: #{ddqn_forward.1} parent=1 // pred_check
      _
    $region15: #{ddqn_forward.1} parent=1 // pred_check_branch
      %23 = sbr.rel (0) target = $region17
    $region16: #{ddqn_forward.1} parent=1 // pred_region
      %s25 = ssub.s32 512, 512
      %26 = vsyncadd [#allocation3], %s25
      %s27 = sshll.u32 [#allocation2], 4
      %s28 = int_to_ptr.vmem [resolvable:$true] %s27
      %33 = dma.hbm_to_vmem [thread:$0]  %s3, 512, %s28, [#allocation3], 64, 64, 4
    $region17: #{ddqn_forward.1} parent=1 // pred_fallthru
      _
    // Predicated region
    $region18: #{ddqn_forward.1} parent=1 // pred_check
      _
    $region19: #{ddqn_forward.1} parent=1 // pred_check_branch
      %35 = sbr.rel (0) target = $region21
    $region20: #{ddqn_forward.1} parent=1 // pred_region
      _
    $region21: #{ddqn_forward.1} parent=1 // pred_fallthru
      _
    // Predicated region
    $region22: #{ddqn_forward.1} parent=1 // pred_check
      _
    $region23: #{ddqn_forward.1} parent=1 // pred_check_branch
      %37 = sbr.rel (0) target = $region25
    $region24: #{ddqn_forward.1} parent=1 // pred_region
      %s39 = ssub.s32 512, 512
      %40 = vsyncadd [#allocation5], %s39
      %s41 = sshll.u32 [#allocation4], 4
      %s42 = int_to_ptr.vmem [resolvable:$true] %s41
      %47 = dma.hbm_to_vmem [thread:$0]  %s5, 512, %s42, [#allocation5], 64, 64, 4
    $region25: #{ddqn_forward.1} parent=1 // pred_fallthru
      _
    // Predicated region
    $region26: #{ddqn_forward.1} parent=1 // pred_check
      _
    $region27: #{ddqn_forward.1} parent=1 // pred_check_branch
      %49 = sbr.rel (0) target = $region29
    $region28: #{ddqn_forward.1} parent=1 // pred_region
      _
    $region29: #{ddqn_forward.1} parent=1 // pred_fallthru
      _
    // Predicated region
    $region30: #{ddqn_forward.1} parent=1 // pred_check
      _
    $region31: #{ddqn_forward.1} parent=1 // pred_check_branch
      %51 = sbr.rel (0) target = $region33
    $region32: #{ddqn_forward.1} parent=1 // pred_region
      %s53 = ssub.s32 512, 512
      %54 = vsyncadd [#allocation5], %s53
      %s55 = sshll.u32 [#allocation6], 4
      %s56 = int_to_ptr.vmem [resolvable:$true] %s55
      %61 = dma.hbm_to_vmem [thread:$0]  %s7, 512, %s56, [#allocation5], 64, 64, 4
    $region33: #{ddqn_forward.1} parent=1 // pred_fallthru
      _
    // Predicated region
    $region34: #{ddqn_forward.1} parent=1 // pred_check
      _
    $region35: #{ddqn_forward.1} parent=1 // pred_check_branch
      %63 = sbr.rel (0) target = $region37
    $region36: #{ddqn_forward.1} parent=1 // pred_region
      _
    $region37: #{ddqn_forward.1} parent=1 // pred_fallthru
      _
    // Predicated region
    $region38: #{ddqn_forward.1} parent=1 // pred_check
      _
    $region39: #{ddqn_forward.1} parent=1 // pred_check_branch
      %65 = sbr.rel (0) target = $region41
    $region40: #{ddqn_forward.1} parent=1 // pred_region
      %66 = dma.done [#allocation3], 512
    $region41: #{ddqn_forward.1} parent=1 // pred_fallthru
      _
    // Predicated region
    $region42: #{ddqn_forward.1} parent=1 // pred_check
      _
    $region43: #{ddqn_forward.1} parent=1 // pred_check_branch
      %68 = sbr.rel (0) target = $region45
    $region44: #{ddqn_forward.1} parent=1 // pred_region
      %69 = dma.done [#allocation5], 512
    $region45: #{ddqn_forward.1} parent=1 // pred_fallthru
      _
    // Predicated region
    $region46: #{ddqn_forward.1} parent=1 // pred_check
      _
    $region47: #{ddqn_forward.1} parent=1 // pred_check_branch
      %71 = sbr.rel (0) target = $region49
    $region48: #{ddqn_forward.1} parent=1 // pred_region
      %72 = dma.done [#allocation5], 512
    $region49: #{ddqn_forward.1} parent=1 // pred_fallthru
      _
    %v74 = vld [vmem:[%s0] sm:$0xff]
    %v75 = vpack.c.bf16 %v74, %v74
    %v76 = vld [vmem:[%s1] sm:$0xf]
    %v77 = vld [vmem:[%s2] sm:$0x1]
    %v79 = vlaneseq
    %v80 = vshrl.u32 %v79, 7
    %v81 = vsub.s32 0, %v80
    %v82 = vrot.slane %v77, %v81
    %vm84 = vcmask 64512
    %v86 = vsel %vm84, %v75, 0
    %vm88 = vcmask 1043456
    %v90 = vsel %vm88, %v76, 0
    %92 = vmatprep.subr.bf16.mxu0 0
    %93 = vmatpush1.bf16.msra.mxu0 0
    %94 = vmatprep.subr.bf16.mxu0 0
    %95 = vmatpush1.bf16.msra.mxu0 0
    %96 = vmatprep.subr.bf16.mxu0 0
    %97 = vmatpush1.bf16.msra.mxu0 0
    %98 = vmatprep.subr.bf16.mxu0 0
    %99 = vmatpush1.bf16.msra.mxu0 0
    %100 = vmatprep.subr.bf16.mxu0 0
    %101 = vmatpush1.bf16.msra.mxu0 0
    %102 = vmatprep.subr.bf16.mxu0 0
    %103 = vmatpush1.bf16.msra.mxu0 0
    %104 = vmatprep.subr.bf16.mxu0 0
    %105 = vmatpush1.bf16.msra.mxu0 0
    %106 = vmatprep.subr.bf16.mxu0 0
    %107 = vmatpush1.bf16.msra.mxu0 %v90
    %108 = vmatprep.subr.bf16.mxu0 0
    %109 = vmatpush2.bf16.msra.mxu0 0
    %110 = vmatprep.subr.bf16.mxu0 0
    %111 = vmatpush2.bf16.msra.mxu0 0
    %112 = vmatprep.subr.bf16.mxu0 0
    %113 = vmatpush2.bf16.msra.mxu0 0
    %114 = vmatprep.subr.bf16.mxu0 0
    %115 = vmatpush2.bf16.msra.mxu0 0
    %116 = vmatprep.subr.bf16.mxu0 0
    %117 = vmatpush2.bf16.msra.mxu0 0
    %118 = vmatprep.subr.bf16.mxu0 0
    %119 = vmatpush2.bf16.msra.mxu0 0
    %120 = vmatprep.subr.bf16.mxu0 0
    %121 = vmatpush2.bf16.msra.mxu0 0
    %122 = vmatprep.subr.bf16.mxu0 0
    %123 = vmatpush2.bf16.msra.mxu0 0
    %124 = vmatprep.mubr.bf16.mxu0 0
    %125 = vmatmul.mubr.bf16.gmra.mxu0 %v86
    %v126 = vpop.f32.mrf.mxu0
    %v127 = vadd.f32 %v82, %v126
    %v128 = vpop.f32.mrf.mxu0
    %v129 = vpop.f32.mrf.mxu0
    %v130 = vpop.f32.mrf.mxu0
    %131 = vdwg.mxu0
    %v132 = vmax.f32 %v127, 0.0
    %v133 = vpack.c.bf16 %v132, %v132
    %v134 = vld [vmem:[#allocation2] sm:$0xf]
    %v135 = vld [vmem:[#allocation2 + $0x4] sm:$0xf]
    %v136 = vld [vmem:[#allocation2 + $0x8] sm:$0xf]
    %v137 = vld [vmem:[#allocation2 + $0xc] sm:$0xf]
    %v138 = vld [vmem:[#allocation2 + $0x10] sm:$0xf]
    %v139 = vld [vmem:[#allocation2 + $0x14] sm:$0xf]
    %v140 = vld [vmem:[#allocation2 + $0x18] sm:$0xf]
    %v141 = vld [vmem:[#allocation2 + $0x1c] sm:$0xf]
    %v142 = vld [vmem:[%s4] sm:$0x1]
    %v144 = vlaneseq
    %v145 = vshrl.u32 %v144, 7
    %v146 = vsub.s32 0, %v145
    %v147 = vrot.slane %v142, %v146
    %v157 = vunpack.c.l.b16 %v134
    %v158 = vunpack.c.l.b16 %v135
    %v159 = vunpack.c.l.b16 %v136
    %v160 = vunpack.c.l.b16 %v137
    %v161 = vunpack.c.l.b16 %v138
    %v162 = vunpack.c.l.b16 %v139
    %v163 = vunpack.c.l.b16 %v140
    %v164 = vunpack.c.l.b16 %v141
    %v165 = vpack.c.b16 %v158, %v157
    %v166 = vpack.c.b16 %v160, %v159
    %v167 = vpack.c.b16 %v162, %v161
    %v168 = vpack.c.b16 %v164, %v163
    %vm173 = vcmask 523264
    %v175 = vsel %vm173, %v133, 0
    %177 = vmatprep.subr.bf16.mxu0 0
    %178 = vmatpush1.bf16.msra.mxu0 0
    %179 = vmatprep.subr.bf16.mxu0 0
    %180 = vmatpush1.bf16.msra.mxu0 0
    %181 = vmatprep.subr.bf16.mxu0 0
    %182 = vmatpush1.bf16.msra.mxu0 0
    %183 = vmatprep.subr.bf16.mxu0 0
    %184 = vmatpush1.bf16.msra.mxu0 0
    %185 = vmatprep.subr.bf16.mxu0 0
    %186 = vmatpush1.bf16.msra.mxu0 %v168
    %187 = vmatprep.subr.bf16.mxu0 0
    %188 = vmatpush1.bf16.msra.mxu0 %v167
    %189 = vmatprep.subr.bf16.mxu0 0
    %190 = vmatpush1.bf16.msra.mxu0 %v166
    %191 = vmatprep.subr.bf16.mxu0 0
    %192 = vmatpush1.bf16.msra.mxu0 %v165
    %193 = vmatprep.subr.bf16.mxu0 0
    %194 = vmatpush2.bf16.msra.mxu0 0
    %195 = vmatprep.subr.bf16.mxu0 0
    %196 = vmatpush2.bf16.msra.mxu0 0
    %197 = vmatprep.subr.bf16.mxu0 0
    %198 = vmatpush2.bf16.msra.mxu0 0
    %199 = vmatprep.subr.bf16.mxu0 0
    %200 = vmatpush2.bf16.msra.mxu0 0
    %201 = vmatprep.subr.bf16.mxu0 0
    %202 = vmatpush2.bf16.msra.mxu0 0
    %203 = vmatprep.subr.bf16.mxu0 0
    %204 = vmatpush2.bf16.msra.mxu0 0
    %205 = vmatprep.subr.bf16.mxu0 0
    %206 = vmatpush2.bf16.msra.mxu0 0
    %207 = vmatprep.subr.bf16.mxu0 0
    %208 = vmatpush2.bf16.msra.mxu0 0
    %209 = vmatprep.mubr.bf16.mxu0 0
    %210 = vmatmul.mubr.bf16.gmra.mxu0 %v175
    %v211 = vpop.f32.mrf.mxu0
    %v212 = vadd.f32 %v147, %v211
    %v213 = vpop.f32.mrf.mxu0
    %v214 = vpop.f32.mrf.mxu0
    %v215 = vpop.f32.mrf.mxu0
    %216 = vdwg.mxu0
    %v217 = vmax.f32 %v212, 0.0
    %v218 = vpack.c.bf16 %v217, %v217
    %v219 = vld [vmem:[#allocation4] sm:$0xf]
    %v220 = vld [vmem:[#allocation4 + $0x4] sm:$0xf]
    %v221 = vld [vmem:[#allocation4 + $0x8] sm:$0xf]
    %v222 = vld [vmem:[#allocation4 + $0xc] sm:$0xf]
    %v223 = vld [vmem:[#allocation4 + $0x10] sm:$0xf]
    %v224 = vld [vmem:[#allocation4 + $0x14] sm:$0xf]
    %v225 = vld [vmem:[#allocation4 + $0x18] sm:$0xf]
    %v226 = vld [vmem:[#allocation4 + $0x1c] sm:$0xf]
    %v227 = vld [vmem:[%s6] sm:$0x1]
    %v229 = vlaneseq
    %v230 = vshrl.u32 %v229, 7
    %v231 = vsub.s32 0, %v230
    %v232 = vrot.slane %v227, %v231
    %v242 = vunpack.c.l.b16 %v219
    %v243 = vunpack.c.l.b16 %v220
    %v244 = vunpack.c.l.b16 %v221
    %v245 = vunpack.c.l.b16 %v222
    %v246 = vunpack.c.l.b16 %v223
    %v247 = vunpack.c.l.b16 %v224
    %v248 = vunpack.c.l.b16 %v225
    %v249 = vunpack.c.l.b16 %v226
    %v250 = vpack.c.b16 %v243, %v242
    %v251 = vpack.c.b16 %v245, %v244
    %v252 = vpack.c.b16 %v247, %v246
    %v253 = vpack.c.b16 %v249, %v248
    %v259 = vsel %vm173, %v218, 0
    %261 = vmatprep.subr.bf16.mxu0 0
    %262 = vmatpush1.bf16.msra.mxu0 0
    %263 = vmatprep.subr.bf16.mxu0 0
    %264 = vmatpush1.bf16.msra.mxu0 0
    %265 = vmatprep.subr.bf16.mxu0 0
    %266 = vmatpush1.bf16.msra.mxu0 0
    %267 = vmatprep.subr.bf16.mxu0 0
    %268 = vmatpush1.bf16.msra.mxu0 0
    %269 = vmatprep.subr.bf16.mxu0 0
    %270 = vmatpush1.bf16.msra.mxu0 %v253
    %271 = vmatprep.subr.bf16.mxu0 0
    %272 = vmatpush1.bf16.msra.mxu0 %v252
    %273 = vmatprep.subr.bf16.mxu0 0
    %274 = vmatpush1.bf16.msra.mxu0 %v251
    %275 = vmatprep.subr.bf16.mxu0 0
    %276 = vmatpush1.bf16.msra.mxu0 %v250
    %277 = vmatprep.subr.bf16.mxu0 0
    %278 = vmatpush2.bf16.msra.mxu0 0
    %279 = vmatprep.subr.bf16.mxu0 0
    %280 = vmatpush2.bf16.msra.mxu0 0
    %281 = vmatprep.subr.bf16.mxu0 0
    %282 = vmatpush2.bf16.msra.mxu0 0
    %283 = vmatprep.subr.bf16.mxu0 0
    %284 = vmatpush2.bf16.msra.mxu0 0
    %285 = vmatprep.subr.bf16.mxu0 0
    %286 = vmatpush2.bf16.msra.mxu0 0
    %287 = vmatprep.subr.bf16.mxu0 0
    %288 = vmatpush2.bf16.msra.mxu0 0
    %289 = vmatprep.subr.bf16.mxu0 0
    %290 = vmatpush2.bf16.msra.mxu0 0
    %291 = vmatprep.subr.bf16.mxu0 0
    %292 = vmatpush2.bf16.msra.mxu0 0
    %293 = vmatprep.mubr.bf16.mxu0 0
    %294 = vmatmul.mubr.bf16.gmra.mxu0 %v259
    %v295 = vpop.f32.mrf.mxu0
    %v296 = vadd.f32 %v232, %v295
    %v297 = vpop.f32.mrf.mxu0
    %v298 = vpop.f32.mrf.mxu0
    %v299 = vpop.f32.mrf.mxu0
    %300 = vdwg.mxu0
    %v301 = vmax.f32 %v296, 0.0
    %v302 = vpack.c.bf16 %v301, %v301
    %v303 = vld [vmem:[#allocation6] sm:$0xf]
    %v304 = vld [vmem:[#allocation6 + $0x4] sm:$0xf]
    %v305 = vld [vmem:[#allocation6 + $0x8] sm:$0xf]
    %v306 = vld [vmem:[#allocation6 + $0xc] sm:$0xf]
    %v307 = vld [vmem:[#allocation6 + $0x10] sm:$0xf]
    %v308 = vld [vmem:[#allocation6 + $0x14] sm:$0xf]
    %v309 = vld [vmem:[#allocation6 + $0x18] sm:$0xf]
    %v310 = vld [vmem:[#allocation6 + $0x1c] sm:$0xf]
    %v311 = vld [vmem:[%s8] sm:$0x1]
    %v313 = vlaneseq
    %v314 = vshrl.u32 %v313, 7
    %v315 = vsub.s32 0, %v314
    %v316 = vrot.slane %v311, %v315
    %v326 = vunpack.c.l.b16 %v303
    %v327 = vunpack.c.l.b16 %v304
    %v328 = vunpack.c.l.b16 %v305
    %v329 = vunpack.c.l.b16 %v306
    %v330 = vunpack.c.l.b16 %v307
    %v331 = vunpack.c.l.b16 %v308
    %v332 = vunpack.c.l.b16 %v309
    %v333 = vunpack.c.l.b16 %v310
    %v334 = vpack.c.b16 %v327, %v326
    %v335 = vpack.c.b16 %v329, %v328
    %v336 = vpack.c.b16 %v331, %v330
    %v337 = vpack.c.b16 %v333, %v332
    %v343 = vsel %vm173, %v302, 0
    %345 = vmatprep.subr.bf16.mxu0 0
    %346 = vmatpush1.bf16.msra.mxu0 0
    %347 = vmatprep.subr.bf16.mxu0 0
    %348 = vmatpush1.bf16.msra.mxu0 0
    %349 = vmatprep.subr.bf16.mxu0 0
    %350 = vmatpush1.bf16.msra.mxu0 0
    %351 = vmatprep.subr.bf16.mxu0 0
    %352 = vmatpush1.bf16.msra.mxu0 0
    %353 = vmatprep.subr.bf16.mxu0 0
    %354 = vmatpush1.bf16.msra.mxu0 %v337
    %355 = vmatprep.subr.bf16.mxu0 0
    %356 = vmatpush1.bf16.msra.mxu0 %v336
    %357 = vmatprep.subr.bf16.mxu0 0
    %358 = vmatpush1.bf16.msra.mxu0 %v335
    %359 = vmatprep.subr.bf16.mxu0 0
    %360 = vmatpush1.bf16.msra.mxu0 %v334
    %361 = vmatprep.subr.bf16.mxu0 0
    %362 = vmatpush2.bf16.msra.mxu0 0
    %363 = vmatprep.subr.bf16.mxu0 0
    %364 = vmatpush2.bf16.msra.mxu0 0
    %365 = vmatprep.subr.bf16.mxu0 0
    %366 = vmatpush2.bf16.msra.mxu0 0
    %367 = vmatprep.subr.bf16.mxu0 0
    %368 = vmatpush2.bf16.msra.mxu0 0
    %369 = vmatprep.subr.bf16.mxu0 0
    %370 = vmatpush2.bf16.msra.mxu0 0
    %371 = vmatprep.subr.bf16.mxu0 0
    %372 = vmatpush2.bf16.msra.mxu0 0
    %373 = vmatprep.subr.bf16.mxu0 0
    %374 = vmatpush2.bf16.msra.mxu0 0
    %375 = vmatprep.subr.bf16.mxu0 0
    %376 = vmatpush2.bf16.msra.mxu0 0
    %377 = vmatprep.mubr.bf16.mxu0 0
    %378 = vmatmul.mubr.bf16.gmra.mxu0 %v343
    %v379 = vpop.f32.mrf.mxu0
    %v380 = vadd.f32 %v316, %v379
    %v381 = vpop.f32.mrf.mxu0
    %v382 = vpop.f32.mrf.mxu0
    %v383 = vpop.f32.mrf.mxu0
    %384 = vdwg.mxu0
    %vm385 = vcmask 31744
    %386 = vst.msk [vmem:[%s9] sm:$0xff] %vm385, %v380
    // Predicated region
    $region50: #{ddqn_forward.1} parent=1 // pred_check
      _
    $region51: #{ddqn_forward.1} parent=1 // pred_check_branch
      %388 = sbr.rel (0) target = $region53
    $region52: #{ddqn_forward.1} parent=1 // pred_region
      _
    $region53: #{ddqn_forward.1} parent=1 // pred_fallthru
      _
    // Predicated region
    $region54: #{ddqn_forward.1} parent=1 // pred_check
      _
    $region55: #{ddqn_forward.1} parent=1 // pred_check_branch
      %390 = sbr.rel (0) target = $region57
    $region56: #{ddqn_forward.1} parent=1 // pred_region
      _
    $region57: #{ddqn_forward.1} parent=1 // pred_fallthru
      _
    %391 = vsyncpa [#allocation3], 1
    %392 = vsyncpa [#allocation5], 1

</llo_original>
